<compile_context>
chip_gen: v7x
topology: tpu7x:2x2x1
jax: 0.10.0
libtpu: 0.0.40
codegen_flags: <defaults>
</compile_context>

<pallas_src>
import math
import functools

import jax
import jax.numpy as jnp
from jax import lax
from jax.experimental import pallas as pl
from jax.experimental.pallas import tpu as pltpu


# ----------------------------- Pallas kernel --------------------------------

def _crop_resize_flip_kernel(wy_ref, wxt_ref, x_ref, o_ref, *scratch, cb, slab_out):
    """One grid step processes `cb` stacked images.

    wy_ref : (S, H)       bf16  row-resampling weights (crop + vflip folded in)
    wxt_ref: (W, S)       bf16  col-resampling weights, pre-transposed (crop + hflip)
    x_ref  : (cb, H, W)   f32   block of cb flattened (N*C) images
    o_ref  : (1, S, cb*S) if slab_out (lane-dense slab)  else  (cb, S, S)
    scratch: [(cb*H, S) bf16 VMEM]  only for the non-slab (S >= 128) path
    """
    S, H = wy_ref.shape
    W = wxt_ref.shape[0]

    # Column resample for ALL cb images in one stacked MXU matmul (M = cb*H).
    xb = x_ref[...].reshape(cb * H, W).astype(jnp.bfloat16)             # (cb*H, W)
    tmp = jnp.dot(xb, wxt_ref[...],
                  preferred_element_type=jnp.float32)                   # (cb*H, S)
    wy = wy_ref[...]                                                    # (S, H)

    if slab_out:
        # Rearrange (cb*H, S) -> (H, cb*S) and do the row resample for all cb
        # images in ONE stacked matmul that lands directly in the slab layout.
        t = jnp.transpose(tmp.reshape(cb, H, S), (1, 0, 2))             # (H, cb, S)
        t = t.reshape(H, cb * S).astype(jnp.bfloat16)                   # (H, cb*S)
        r = jnp.dot(wy, t, preferred_element_type=jnp.float32)          # (S, cb*S)
        o_ref[0] = r.astype(o_ref.dtype)                                # one dense store
    else:
        # S >= 128: output is already lane-dense in native layout.  Slice the
        # intermediate as a Ref (zero-cost views) inside an unrolled fori_loop.
        tmp_ref = scratch[0]
        tmp_ref[...] = tmp.astype(jnp.bfloat16)

        def body(b, carry):
            src = tmp_ref[pl.ds(b * H, H), :]                           # (H, S) view
            r = jnp.dot(wy, src, preferred_element_type=jnp.float32)    # (S, S)
            o_ref[b] = r.astype(o_ref.dtype)
            return carry

        lax.fori_loop(0, cb, body, 0, unroll=True)


# ------------------------------ JAX glue -------------------------------------

def _bilinear_weights(out_size, in_size, start, crop_len, flip):
    """(out_size, in_size) bilinear resampling matrix for the crop window
    [start, start+crop_len) resized to out_size (half-pixel convention),
    optionally flipped along the output axis.  Samples are clamped to the crop
    window (torchvision crops first, then resizes)."""
    o = jnp.arange(out_size, dtype=jnp.float32)
    o = jnp.where(flip, (out_size - 1) - o, o)                  # flip = reverse output idx
    src = (o + 0.5) * (crop_len / out_size) - 0.5 + start       # absolute src coordinate
    src = jnp.clip(src, start, start + crop_len - 1.0)          # stay inside the crop
    src = jnp.clip(src, 0.0, float(in_size - 1))
    lo = jnp.floor(src)
    frac = src - lo
    lo_i = lo.astype(jnp.int32)
    hi_i = jnp.minimum(lo_i + 1, in_size - 1)
    cols = jnp.arange(in_size, dtype=jnp.int32)
    w_lo = (cols[None, :] == lo_i[:, None]).astype(jnp.float32) * (1.0 - frac)[:, None]
    w_hi = (cols[None, :] == hi_i[:, None]).astype(jnp.float32) * frac[:, None]
    return w_lo + w_hi


def _sample_resample_weights(key, H, W, S):
    """Sample one RandomResizedCrop + flip parameter set and fold it into the
    two bf16 resampling matrices (Wy: (S,H), Wx^T: (W,S))."""
    ks, kr, ki, kj, kh, kv = jax.random.split(key, 6)

    # --- RandomResizedCrop.get_params, scale=(0.8, 1.0) ---
    # TODO(synk): torchvision samples up to 10 candidate crops with a center-crop
    # fallback; we use a single clipped draw from the same distribution family.
    scale = jax.random.uniform(ks, (), minval=0.8, maxval=1.0)
    log_ratio = jax.random.uniform(kr, (), minval=math.log(3.0 / 4.0),
                                   maxval=math.log(4.0 / 3.0))
    ratio = jnp.exp(log_ratio)
    target_area = scale * (H * W)
    crop_w = jnp.clip(jnp.round(jnp.sqrt(target_area * ratio)), 1.0, float(W))
    crop_h = jnp.clip(jnp.round(jnp.sqrt(target_area / ratio)), 1.0, float(H))
    top = jnp.floor(jax.random.uniform(ki, ()) * (H - crop_h + 1.0))
    left = jnp.floor(jax.random.uniform(kj, ()) * (W - crop_w + 1.0))

    # --- Random flips (p = 0.5 each) ---
    hflip = jax.random.bernoulli(kh, 0.5)
    vflip = jax.random.bernoulli(kv, 0.5)

    # TODO(synk): plain bilinear taps (no antialias filter on downscale).
    wy = _bilinear_weights(S, H, top, crop_h, vflip).astype(jnp.bfloat16)       # (S, H)
    wxt = _bilinear_weights(S, W, left, crop_w, hflip).T.astype(jnp.bfloat16)   # (W, S)
    return wy, wxt


@functools.lru_cache(maxsize=None)
def _vmem_budget():
    """(block budget, vmem_limit_bytes), generation-aware (v5e/v6e: 128 MiB VMEM,
    v7x: 64 MiB)."""
    try:
        cap = int(getattr(pltpu.get_tpu_info(), "vmem_capacity_bytes",
                          64 * 1024 * 1024))
    except Exception:
        cap = 64 * 1024 * 1024
    if cap >= 96 * 1024 * 1024:                      # v5e / v6e (128 MiB)
        return 80 * 1024 * 1024, 104 * 1024 * 1024
    return 28 * 1024 * 1024, 48 * 1024 * 1024        # v7x (64 MiB) / unknown


def _pick_channel_block(nc, h, w, s, budget):
    """Largest divisor of nc whose block (2-deep pipelined in/out buffers PLUS
    in-kernel intermediates) fits the VMEM budget, capped so that the grid has
    at least 2 steps (keeps both v7x TensorCores busy)."""
    best = 1
    max_cb = 1 if nc <= 1 else max(1, nc // 2)
    for cb in range(1, max_cb + 1):
        if nc % cb:
            continue
        in_bytes = 2 * cb * h * w * 4                # double-buffered f32 input block
        out_bytes = 2 * cb * s * s * 4               # double-buffered f32 output block
        interm = (cb * h * w * 2                     # bf16 copy of the input block
                  + cb * h * s * (4 + 2 + 2)         # tmp f32 + bf16 + rearranged slab
                  + cb * s * s * 4                   # f32 matmul result
                  + (s * h + w * s) * 2 * 2)         # resident bf16 weight blocks
        if in_bytes + out_bytes + interm <= budget:
            best = cb
    return best


@functools.partial(jax.jit, static_argnames=("img_size",))
def data_augmentation(x, key, img_size=16):
    """Forward pass of DataAugmentation.

    x: (N, C, H, W) float32.  Returns (N, C, img_size, img_size) float32.
    One random parameter set per call (torchvision semantics on a 4-D tensor).
    """
    N, C, H, W = x.shape
    S = img_size
    NC = N * C

    wy, wxt = _sample_resample_weights(key, H, W, S)

    budget, vmem_limit = _vmem_budget()
    CB = _pick_channel_block(NC, H, W, S, budget)
    G = NC // CB
    slab_out = S < 128                 # lane-dense slab output for small img_size

    x3 = x.reshape(NC, H, W)           # free reshape; block = CB whole images

    if slab_out:
        out_shape = jax.ShapeDtypeStruct((G, S, CB * S), x.dtype)
        out_spec = pl.BlockSpec((1, S, CB * S), lambda g: (g, 0, 0))
        scratch_shapes = []
    else:
        out_shape = jax.ShapeDtypeStruct((NC, S, S), x.dtype)
        out_spec = pl.BlockSpec((CB, S, S), lambda g: (g, 0, 0))
        scratch_shapes = [pltpu.VMEM((CB * H, S), jnp.bfloat16)]

    flops = 2.0 * NC * H * S * (W + S)
    bytes_accessed = (x.size * x.dtype.itemsize
                      + NC * S * S * x.dtype.itemsize
                      + (S * H + W * S) * 2)
    cost = pl.CostEstimate(flops=int(flops), transcendentals=0,
                           bytes_accessed=int(bytes_accessed))

    kernel = functools.partial(_crop_resize_flip_kernel, cb=CB, slab_out=slab_out)

    out = pl.pallas_call(
        kernel,
        out_shape=out_shape,
        grid_spec=pltpu.PrefetchScalarGridSpec(
            num_scalar_prefetch=0,
            grid=(G,),
            in_specs=[
                pl.BlockSpec((S, H), lambda g: (0, 0)),       # wy   (VMEM-resident)
                pl.BlockSpec((W, S), lambda g: (0, 0)),       # wx^T (VMEM-resident)
                pl.BlockSpec((CB, H, W), lambda g: (g, 0, 0)),
            ],
            out_specs=out_spec,
            scratch_shapes=scratch_shapes,
        ),
        compiler_params=pltpu.CompilerParams(
            dimension_semantics=("parallel",),
            vmem_limit_bytes=vmem_limit,
        ),
        cost_estimate=cost,
    )(wy, wxt, x3)

    if slab_out:
        # (G, S, CB*S) slab -> (N, C, S, S): layout plumbing outside the kernel.
        y = out.reshape(G, S, CB, S).transpose(0, 2, 1, 3).reshape(N, C, S, S)
    else:
        y = out.reshape(N, C, S, S)    # free reshape (native layout, no transpose)
    return y


# ------------------------------ demo / check ---------------------------------

if __name__ == "__main__":
    key = jax.random.PRNGKey(0)
    kx, kp = jax.random.split(key)

    N, C, H, W = 2, 4, 16, 16
    IMG_SIZE = 16                       # small stand-in for the module's 256
    x = jax.random.uniform(kx, (N, C, H, W), dtype=jnp.float32)

    y = data_augmentation(x, kp, img_size=IMG_SIZE)
    y = jax.block_until_ready(y)

    assert y.shape == (N, C, IMG_SIZE, IMG_SIZE), y.shape
    assert y.dtype == x.dtype
    assert bool(jnp.all(jnp.isfinite(y)))

    # Pure-JAX reference using the identical (bf16) resampling matrices.
    wy_ref_mat, wxt_ref_mat = _sample_resample_weights(kp, H, W, IMG_SIZE)
    y_ref = jnp.einsum("sh,nchw,wj->ncsj",
                       wy_ref_mat.astype(jnp.float32), x,
                       wxt_ref_mat.astype(jnp.float32))
    max_err = float(jnp.max(jnp.abs(y - y_ref)))
    assert max_err < 5e-2, max_err

    print("KERNEL_OK")
</pallas_src>

<mosaic_0001>
module attributes {stable_mosaic.version = 11 : i64} {
  func.func @_crop_resize_flip_kernel(%arg0: i32, %arg1: memref<16x16xbf16, #tpu.memory_space<vmem>>, %arg2: memref<16x16xbf16, #tpu.memory_space<vmem>>, %arg3: memref<4x16x16xf32, #tpu.memory_space<vmem>>, %arg4: memref<1x16x64xf32, #tpu.memory_space<vmem>>) attributes {dimension_semantics = [#tpu.dimension_semantics<parallel>], iteration_bounds = array<i64: 2>, scalar_prefetch = 0 : i64, scratch_operands = 0 : i64, tpu.core_type = #tpu.core_type<tc>, window_params = [{pipeline_mode = #tpu.pipeline_mode<synchronous>, transform_indices = @transform_0, window_bounds = array<i64: 16, 16>}, {pipeline_mode = #tpu.pipeline_mode<synchronous>, transform_indices = @transform_1, window_bounds = array<i64: 16, 16>}, {transform_indices = @transform_2, window_bounds = array<i64: 4, 16, 16>}, {transform_indices = @transform_3, window_bounds = array<i64: 1, 16, 64>}]} {
    %c0 = arith.constant 0 : index
    %c0_0 = arith.constant 0 : index
    %c0_1 = arith.constant 0 : index
    %0 = vector.load %arg3[%c0, %c0_0, %c0_1] : memref<4x16x16xf32, #tpu.memory_space<vmem>>, vector<4x16x16xf32>
    %1 = vector.shape_cast %0 : vector<4x16x16xf32> to vector<64x16xf32>
    %2 = arith.truncf %1 : vector<64x16xf32> to vector<64x16xbf16>
    %c0_2 = arith.constant 0 : index
    %c0_3 = arith.constant 0 : index
    %3 = vector.load %arg2[%c0_2, %c0_3] : memref<16x16xbf16, #tpu.memory_space<vmem>>, vector<16x16xbf16>
    %cst = arith.constant dense<0.000000e+00> : vector<64x16xf32>
    %4 = tpu.matmul %2, %3, %cst {dimension_numbers = #tpu.dot_dimension_numbers<[1], [0], [0], [1], [0, 0, 1, 1], [], []>} : vector<64x16xbf16>, vector<16x16xbf16>, vector<64x16xf32> -> vector<64x16xf32>
    %c0_4 = arith.constant 0 : index
    %c0_5 = arith.constant 0 : index
    %5 = vector.load %arg1[%c0_4, %c0_5] : memref<16x16xbf16, #tpu.memory_space<vmem>>, vector<16x16xbf16>
    %6 = vector.shape_cast %4 : vector<64x16xf32> to vector<4x16x16xf32>
    %7 = tpu.transpose %6, [1, 0, 2] : vector<4x16x16xf32> -> vector<16x4x16xf32>
    %8 = vector.shape_cast %7 : vector<16x4x16xf32> to vector<16x64xf32>
    %9 = arith.truncf %8 : vector<16x64xf32> to vector<16x64xbf16>
    %cst_6 = arith.constant dense<0.000000e+00> : vector<16x64xf32>
    %10 = tpu.matmul %5, %9, %cst_6 {dimension_numbers = #tpu.dot_dimension_numbers<[1], [0], [0], [1], [0, 0, 1, 1], [], []>} : vector<16x16xbf16>, vector<16x64xbf16>, vector<16x64xf32> -> vector<16x64xf32>
    %c0_7 = arith.constant 0 : index
    %c0_8 = arith.constant 0 : index
    %c0_9 = arith.constant 0 : index
    %11 = vector.load %arg4[%c0_7, %c0_8, %c0_9] : memref<1x16x64xf32, #tpu.memory_space<vmem>>, vector<1x16x64xf32>
    %12 = vector.shape_cast %11 : vector<1x16x64xf32> to vector<16x64xf32>
    %13 = vector.shape_cast %10 : vector<16x64xf32> to vector<1x16x64xf32>
    tpu.vector_store %arg4[%c0_7, %c0_8, %c0_9], %13 {strides = array<i32>} : memref<1x16x64xf32, #tpu.memory_space<vmem>>, vector<1x16x64xf32>,
    return
  }
  func.func @transform_0(%arg0: i32) -> (i32, i32) {
    %c0_i32 = arith.constant 0 : i32
    %c0_i32_0 = arith.constant 0 : i32
    %c0_i32_1 = arith.constant 0 : i32
    return %c0_i32, %c0_i32_0 : i32, i32
  }
  func.func @transform_1(%arg0: i32) -> (i32, i32) {
    %c0_i32 = arith.constant 0 : i32
    %c0_i32_0 = arith.constant 0 : i32
    %c0_i32_1 = arith.constant 0 : i32
    return %c0_i32, %c0_i32_0 : i32, i32
  }
  func.func @transform_2(%arg0: i32) -> (i32, i32, i32) {
    %c0_i32 = arith.constant 0 : i32
    %c0_i32_0 = arith.constant 0 : i32
    %c0_i32_1 = arith.constant 0 : i32
    return %arg0, %c0_i32, %c0_i32_0 : i32, i32, i32
  }
  func.func @transform_3(%arg0: i32) -> (i32, i32, i32) {
    %c0_i32 = arith.constant 0 : i32
    %c0_i32_0 = arith.constant 0 : i32
    %c0_i32_1 = arith.constant 0 : i32
    return %arg0, %c0_i32, %c0_i32_0 : i32, i32, i32
  }
}

</mosaic_0001>

<llo_original>
// kernel: data_augmentation.1
$region0: #{data_augmentation.1}
  #allocation0 [shape = 'u32[]', space=smem, size = 0x4, offset = 0x4, fixed_abs, tag = 'smem constant byte address 0x4 - core index']
  #allocation1 [shape = 'u32[144,128]{1,0:T(1,128)}', space=vmem, size = 0x12000, scoped, tag = 'internal scratch']
  %s0 = inlined_call_operand.vmem [shape: bf16[16,16], index: 0, kind: input, shape index: {}]
  %s1 = inlined_call_operand.vmem [shape: bf16[16,16], index: 1, kind: input, shape index: {}]
  %s2 = inlined_call_operand.vmem [shape: f32[8,16,16], index: 2, kind: input, shape index: {}]
  %s3 = inlined_call_operand.vmem [shape: f32[2,16,64], index: 3, kind: output, shape index: {}]
  %s4 = sld [smem:[#allocation0]]
  $region45: #{data_augmentation.1} parent=0
    _
  %s6 = ssub.s32 1, %s4
  %s7 = scalar_select 0, %s6, %s4
  loop: start=0, step=1, limit=4
  $region2: #{data_augmentation.1} parent=0 // loop_pre_header
    _
  $region3: #{data_augmentation.1} parent=0 // loop_header
    %s9 = sphi 0, %s13
    %p10 = scmp.ge.s32.totalorder %s9, 4
    %s17 = sphi 0, %s17
    %s19 = sphi 0, %s17
    %s20 = sphi 0, %s19
    %s34 = sphi 0, %s20
    %s38 = sphi 0, %s38
    %s40 = sphi 0, %s38
    %s41 = sphi 0, %s40
    %s55 = sphi 0, %s41
    %s61 = sphi 0, %s63
    %s64 = sphi 0, %s61
    %s65 = sphi 0, %s64
    %s81 = sphi 0, %s65
    %s87 = sphi 0, %s89
    %s90 = sphi 0, %s87
    %s91 = sphi 0, %s90
    %s107 = sphi 0, %s91
  $region4: #{data_augmentation.1} parent=0 // loop_header_branch
    %12 = sbr.rel (%p10) target = $region8
  $region5: #{data_augmentation.1} parent=0 // loop_body
    %s14 = ssub.s32 %s9, 1
    %s15 = ssub.s32 %s9, 2
    %s16 = sadd.s32 %s9, 1
    %s18 = sadd.s32 %s17, 1
    %p21 = scmp.eq.s32.totalorder %s9, 1
    %p22 = scmp.ne.s32.totalorder %s17, %s19
    %p23 = scmp.eq.s32.totalorder %s9, 0
    %p24 = por %p22, %p23
    %p25 = scmp.ne.s32.totalorder %s17, %s19
    %p26 = scmp.eq.s32.totalorder %s14, 1
    %p27 = por %p25, %p26
    %p28 = scmp.ne.s32.totalorder %s19, %s20
    %p29 = scmp.eq.s32.totalorder %s14, 0
    %p30 = por %p28, %p29
    %p31 = scmp.ne.s32.totalorder %s19, %s20
    %p32 = scmp.eq.s32.totalorder %s15, 1
    %p33 = por %p31, %p32
    %p35 = scmp.ne.s32.totalorder %s20, %s34
    %p36 = scmp.eq.s32.totalorder %s15, 0
    %p37 = por %p35, %p36
    %s39 = sadd.s32 %s38, 1
    %p42 = scmp.eq.s32.totalorder %s9, 1
    %p43 = scmp.ne.s32.totalorder %s38, %s40
    %p44 = scmp.eq.s32.totalorder %s9, 0
    %p45 = por %p43, %p44
    %p46 = scmp.ne.s32.totalorder %s38, %s40
    %p47 = scmp.eq.s32.totalorder %s14, 1
    %p48 = por %p46, %p47
    %p49 = scmp.ne.s32.totalorder %s40, %s41
    %p50 = scmp.eq.s32.totalorder %s14, 0
    %p51 = por %p49, %p50
    %p52 = scmp.ne.s32.totalorder %s40, %s41
    %p53 = scmp.eq.s32.totalorder %s15, 1
    %p54 = por %p52, %p53
    %p56 = scmp.ne.s32.totalorder %s41, %s55
    %p57 = scmp.eq.s32.totalorder %s15, 0
    %p58 = por %p56, %p57
    %s59 = ssub.s32 %s9, %s16
    %p60 = scmp.eq.s32.totalorder %s59, 0
    %s62 = sadd.s32 %s61, 1
    %s63 = scalar_select %p60, %s61, %s62
    %p66 = pneg %p60
    %p67 = scmp.eq.s32.totalorder %s9, 1
    %p68 = por %p66, %p67
    %p69 = scmp.ne.s32.totalorder %s61, %s64
    %p70 = scmp.eq.s32.totalorder %s9, 0
    %p71 = por %p69, %p70
    %p72 = scmp.ne.s32.totalorder %s61, %s64
    %p73 = scmp.eq.s32.totalorder %s14, 1
    %p74 = por %p72, %p73
    %p75 = scmp.ne.s32.totalorder %s64, %s65
    %p76 = scmp.eq.s32.totalorder %s14, 0
    %p77 = por %p75, %p76
    %p78 = scmp.ne.s32.totalorder %s64, %s65
    %p79 = scmp.eq.s32.totalorder %s15, 1
    %p80 = por %p78, %p79
    %p82 = scmp.ne.s32.totalorder %s65, %s81
    %p83 = scmp.eq.s32.totalorder %s15, 0
    %p84 = por %p82, %p83
    %s85 = ssub.s32 %s9, %s16
    %p86 = scmp.eq.s32.totalorder %s85, 0
    %s88 = sadd.s32 %s87, 1
    %s89 = scalar_select %p86, %s87, %s88
    %p92 = pneg %p86
    %p93 = scmp.eq.s32.totalorder %s9, 1
    %p94 = por %p92, %p93
    %p95 = scmp.ne.s32.totalorder %s87, %s90
    %p96 = scmp.eq.s32.totalorder %s9, 0
    %p97 = por %p95, %p96
    %p98 = scmp.ne.s32.totalorder %s87, %s90
    %p99 = scmp.eq.s32.totalorder %s14, 1
    %p100 = por %p98, %p99
    %p101 = scmp.ne.s32.totalorder %s90, %s91
    %p102 = scmp.eq.s32.totalorder %s14, 0
    %p103 = por %p101, %p102
    %p104 = scmp.ne.s32.totalorder %s90, %s91
    %p105 = scmp.eq.s32.totalorder %s15, 1
    %p106 = por %p104, %p105
    %p108 = scmp.ne.s32.totalorder %s91, %s107
    %p109 = scmp.eq.s32.totalorder %s15, 0
    %p110 = por %p108, %p109
    %p111 = scmp.le.s32.totalorder 1, %s9
    %p112 = scmp.lt.s32.totalorder %s9, 3
    %p113 = pnand %p111, %p112
    %p114 = pneg %p113
    // Predicated region
    $region9: #{data_augmentation.1} parent=5 // pred_check
      _
    $region10: #{data_augmentation.1} parent=5 // pred_check_branch
      %116 = sbr.rel (%p113) target = $region12
    $region11: #{data_augmentation.1} parent=5 // pred_region
      %s117 = ssub.s32 %s9, 1
      // Predicated region
      $region13: #{data_augmentation.1} parent=11 // pred_check
        %p118 = pneg %p30
      $region14: #{data_augmentation.1} parent=11 // pred_check_branch
        %120 = sbr.rel (%p118) target = $region16
      $region15: #{data_augmentation.1} parent=11 // pred_region
        _
      $region16: #{data_augmentation.1} parent=11 // pred_fallthru
        _
      // Predicated region
      $region17: #{data_augmentation.1} parent=11 // pred_check
        %p121 = pneg %p51
      $region18: #{data_augmentation.1} parent=11 // pred_check_branch
        %123 = sbr.rel (%p121) target = $region20
      $region19: #{data_augmentation.1} parent=11 // pred_region
        _
      $region20: #{data_augmentation.1} parent=11 // pred_fallthru
        _
    $region12: #{data_augmentation.1} parent=5 // pred_fallthru
      _
    %p124 = scmp.lt.s32.totalorder %s9, 2
    // Predicated region
    $region21: #{data_augmentation.1} parent=5 // pred_check
      %p125 = pneg %p124
    $region22: #{data_augmentation.1} parent=5 // pred_check_branch
      %127 = sbr.rel (%p125) target = $region24
    $region23: #{data_augmentation.1} parent=5 // pred_region
      // Predicated region
      $region25: #{data_augmentation.1} parent=23 // pred_check
        %p128 = pneg %p71
      $region26: #{data_augmentation.1} parent=23 // pred_check_branch
        %130 = sbr.rel (%p128) target = $region28
      $region27: #{data_augmentation.1} parent=23 // pred_region
        %s131 = smul.u32 4, %s9
        %p132 = scmp.lt.s32.totalorder %s131, 7
        %s133 = scalar_select %p132, %s131, 7
        %s134 = smul.addr %s133, 2
        %s135 = smul.addr %s134, 8
        %s136 = scalar_lea.vmem %s2, %s135
        %s137 = smul.u32 4, %s9
      $region28: #{data_augmentation.1} parent=23 // pred_fallthru
        _
    $region24: #{data_augmentation.1} parent=5 // pred_fallthru
      _
    %p138 = scmp.le.s32.totalorder 1, %s9
    %p139 = scmp.lt.s32.totalorder %s9, 3
    %p140 = pnand %p138, %p139
    %p141 = pneg %p140
    // Predicated region
    $region29: #{data_augmentation.1} parent=5 // pred_check
      _
    $region30: #{data_augmentation.1} parent=5 // pred_check_branch
      %143 = sbr.rel (%p140) target = $region32
    $region31: #{data_augmentation.1} parent=5 // pred_region
      %s144 = ssub.s32 %s9, 1
      %p145 = pneg %p30
      %p146 = pneg %p27
      %p147 = pneg %p51
      %p148 = pneg %p48
      %s149 = smul.u32 4, %s14
      %p150 = scmp.lt.s32.totalorder %s149, 7
      %s151 = scalar_select %p150, %s149, 7
      %s152 = smul.addr %s151, 2
      %s153 = smul.addr %s152, 8
      %s154 = scalar_lea.vmem %s2, %s153
      %p155 = pneg %p77
      %p156 = pneg %p74
      %p157 = pneg %p103
      %p158 = pneg %p100
      %p159 = scmp.lt.s32.totalorder %s14, 1
      %s160 = scalar_select %p159, %s14, 1
      %s161 = smul.addr %s160, 2
      %s162 = smul.addr %s161, 8
      %s163 = scalar_lea.vmem %s3, %s162
      %s164 = smul.u32 4, %s14
      %p165 = scmp.lt.s32.totalorder %s164, 7
      %s166 = scalar_select %p165, %s164, 7
      %s167 = smul.addr %s166, 2
      %s168 = smul.addr %s167, 8
      %s169 = scalar_lea.vmem %s2, %s168
      %s170 = smul.u32 4, %s14
      %p171 = scmp.lt.s32.totalorder %s14, 1
      %s172 = scalar_select %p171, %s14, 1
      %s173 = smul.addr %s172, 2
      %s174 = smul.addr %s173, 8
      %s175 = scalar_lea.vmem %s3, %s174
      %v177 = vld [vmem:[%s169] sm:$0xff]
      %v178 = vld [vmem:[%s169 + $0x8] sm:$0xff]
      %v179 = vld [vmem:[%s169 + $0x10] sm:$0xff]
      %v180 = vld [vmem:[%s169 + $0x18] sm:$0xff]
      %v181 = vld [vmem:[%s169 + $0x20] sm:$0xff]
      %v182 = vld [vmem:[%s169 + $0x28] sm:$0xff]
      %v183 = vld [vmem:[%s169 + $0x30] sm:$0xff]
      %v184 = vld [vmem:[%s169 + $0x38] sm:$0xff]
      %v185 = vpack.c.bf16 %v178, %v177
      %v186 = vpack.c.bf16 %v180, %v179
      %v187 = vpack.c.bf16 %v182, %v181
      %v188 = vpack.c.bf16 %v184, %v183
      %v189 = vld [vmem:[%s1] sm:$0xf]
      %v190 = vld [vmem:[%s1 + $0x4] sm:$0xf]
      %v193 = vunpack.c.l.b16 %v189
      %v194 = vunpack.c.l.b16 %v190
      %v195 = vpack.c.b16 %v194, %v193
      %vm197 = vcmask 130048
      %v199 = vsel %vm197, %v185, 0
      %v202 = vsel %vm197, %v186, 0
      %v205 = vsel %vm197, %v187, 0
      %v208 = vsel %vm197, %v188, 0
      %210 = vmatprep.subr.bf16.mxu0 0
      %211 = vmatpush1.bf16.msra.mxu0 %v195
      %212 = vmatprep.subr.bf16.mxu0 0
      %213 = vmatpush1.bf16.msra.mxu0 0
      %214 = vmatprep.subr.bf16.mxu0 0
      %215 = vmatpush1.bf16.msra.mxu0 0
      %216 = vmatprep.subr.bf16.mxu0 0
      %217 = vmatpush1.bf16.msra.mxu0 0
      %218 = vmatprep.subr.bf16.mxu0 0
      %219 = vmatpush1.bf16.msra.mxu0 0
      %220 = vmatprep.subr.bf16.mxu0 0
      %221 = vmatpush1.bf16.msra.mxu0 0
      %222 = vmatprep.subr.bf16.mxu0 0
      %223 = vmatpush1.bf16.msra.mxu0 0
      %224 = vmatprep.subr.bf16.mxu0 0
      %225 = vmatpush1.bf16.msra.mxu0 0
      %226 = vmatprep.subr.bf16.mxu0 0
      %227 = vmatpush1.bf16.msra.mxu0 0
      %228 = vmatprep.subr.bf16.mxu0 0
      %229 = vmatpush1.bf16.msra.mxu0 0
      %230 = vmatprep.subr.bf16.mxu0 0
      %231 = vmatpush1.bf16.msra.mxu0 0
      %232 = vmatprep.subr.bf16.mxu0 0
      %233 = vmatpush1.bf16.msra.mxu0 0
      %234 = vmatprep.subr.bf16.mxu0 0
      %235 = vmatpush1.bf16.msra.mxu0 0
      %236 = vmatprep.subr.bf16.mxu0 0
      %237 = vmatpush1.bf16.msra.mxu0 0
      %238 = vmatprep.subr.bf16.mxu0 0
      %239 = vmatpush1.bf16.msra.mxu0 0
      %240 = vmatprep.subr.bf16.mxu0 0
      %241 = vmatpush1.bf16.msra.mxu0 0
      %242 = vmatprep.mubr.bf16.mxu0 0
      %243 = vmatmul.mubr.bf16.gmra.mrb[0].mxu0 %v199
      %v244 = vpop.f32.mrb[0].mxu0
      %v245 = vadd.f32 0.0, %v244
      %v246 = vpop.f32.mrb[0].mxu0
      %v247 = vpop.f32.mrb[0].mxu0
      %v248 = vadd.f32 0.0, %v247
      %v249 = vpop.f32.mrb[0].mxu0
      %250 = vmatprep.mubr.bf16.mxu0 0
      %251 = vmatmul.mubr.bf16.gmra.mrb[0].mxu0 %v202
      %v252 = vpop.f32.mrb[0].mxu0
      %v253 = vadd.f32 0.0, %v252
      %v254 = vpop.f32.mrb[0].mxu0
      %v255 = vpop.f32.mrb[0].mxu0
      %v256 = vadd.f32 0.0, %v255
      %v257 = vpop.f32.mrb[0].mxu0
      %258 = vmatprep.mubr.bf16.mxu0 0
      %259 = vmatmul.mubr.bf16.gmra.mrb[0].mxu0 %v205
      %v260 = vpop.f32.mrb[0].mxu0
      %v261 = vadd.f32 0.0, %v260
      %v262 = vpop.f32.mrb[0].mxu0
      %v263 = vpop.f32.mrb[0].mxu0
      %v264 = vadd.f32 0.0, %v263
      %v265 = vpop.f32.mrb[0].mxu0
      %266 = vmatprep.mubr.bf16.mxu0 0
      %267 = vmatmul.mubr.bf16.gmra.mrb[0].mxu0 %v208
      %v268 = vpop.f32.mrb[0].mxu0
      %v269 = vadd.f32 0.0, %v268
      %v270 = vpop.f32.mrb[0].mxu0
      %v271 = vpop.f32.mrb[0].mxu0
      %v272 = vadd.f32 0.0, %v271
      %v273 = vpop.f32.mrb[0].mxu0
      %274 = vdwg.mxu0
      %v275 = vld [vmem:[%s0] sm:$0xf]
      %v276 = vld [vmem:[%s0 + $0x4] sm:$0xf]
      %v277 = vcombine.low %v245, %v261
      %v278 = vcombine.high %v245, %v261
      %v280 = vunpack.c.l.s4 1983009808
      %v281 = vunpack.c.0.s8 %v280
      %v282 = vlaneseq
      %v283 = vshrl.u32 %v282, 7
      %v284 = vsub.s32 %v281, %v283
      %v285 = vrot.slane %v277, %v284
      %v287 = vunpack.c.l.s4 1983009808
      %v288 = vunpack.c.0.s8 %v287
      %v289 = vlaneseq
      %v290 = vshrl.u32 %v289, 7
      %v291 = vsub.s32 %v288, %v290
      %v292 = vrot.slane %v278, %v291
      %v293 = vcombine.low %v253, %v269
      %v294 = vcombine.high %v253, %v269
      %v296 = vunpack.c.l.s4 1983009808
      %v297 = vunpack.c.0.s8 %v296
      %v298 = vlaneseq
      %v299 = vshrl.u32 %v298, 7
      %v300 = vsub.s32 %v297, %v299
      %v301 = vrot.slane %v293, %v300
      %v303 = vunpack.c.l.s4 1983009808
      %v304 = vunpack.c.0.s8 %v303
      %v305 = vlaneseq
      %v306 = vshrl.u32 %v305, 7
      %v307 = vsub.s32 %v304, %v306
      %v308 = vrot.slane %v294, %v307
      %v309 = vcombine.low %v285, %v301
      %v310 = vcombine.high %v285, %v301
      %v312 = vunpack.c.l.s4 1934713408
      %v313 = vunpack.c.0.s8 %v312
      %v314 = vlaneseq
      %v315 = vshrl.u32 %v314, 7
      %v316 = vsub.s32 %v313, %v315
      %v317 = vrot.slane %v309, %v316
      %v319 = vunpack.c.l.s4 1934713408
      %v320 = vunpack.c.0.s8 %v319
      %v321 = vlaneseq
      %v322 = vshrl.u32 %v321, 7
      %v323 = vsub.s32 %v320, %v322
      %v324 = vrot.slane %v310, %v323
      %v325 = vcombine.low %v292, %v308
      %v326 = vcombine.high %v292, %v308
      %v328 = vunpack.c.l.s4 1934713408
      %v329 = vunpack.c.0.s8 %v328
      %v330 = vlaneseq
      %v331 = vshrl.u32 %v330, 7
      %v332 = vsub.s32 %v329, %v331
      %v333 = vrot.slane %v325, %v332
      %v335 = vunpack.c.l.s4 1934713408
      %v336 = vunpack.c.0.s8 %v335
      %v337 = vlaneseq
      %v338 = vshrl.u32 %v337, 7
      %v339 = vsub.s32 %v336, %v338
      %v340 = vrot.slane %v326, %v339
      %v341 = vcombine.high %v317, 0.0
      %v342 = vcombine.high %v324, 0.0
      %v343 = vcombine.high %v333, 0.0
      %v344 = vcombine.high %v340, 0.0
      %v345 = vcombine.low %v248, %v264
      %v346 = vcombine.high %v248, %v264
      %v348 = vunpack.c.l.s4 1983009808
      %v349 = vunpack.c.0.s8 %v348
      %v350 = vlaneseq
      %v351 = vshrl.u32 %v350, 7
      %v352 = vsub.s32 %v349, %v351
      %v353 = vrot.slane %v345, %v352
      %v355 = vunpack.c.l.s4 1983009808
      %v356 = vunpack.c.0.s8 %v355
      %v357 = vlaneseq
      %v358 = vshrl.u32 %v357, 7
      %v359 = vsub.s32 %v356, %v358
      %v360 = vrot.slane %v346, %v359
      %v361 = vcombine.low %v256, %v272
      %v362 = vcombine.high %v256, %v272
      %v364 = vunpack.c.l.s4 1983009808
      %v365 = vunpack.c.0.s8 %v364
      %v366 = vlaneseq
      %v367 = vshrl.u32 %v366, 7
      %v368 = vsub.s32 %v365, %v367
      %v369 = vrot.slane %v361, %v368
      %v371 = vunpack.c.l.s4 1983009808
      %v372 = vunpack.c.0.s8 %v371
      %v373 = vlaneseq
      %v374 = vshrl.u32 %v373, 7
      %v375 = vsub.s32 %v372, %v374
      %v376 = vrot.slane %v362, %v375
      %v377 = vcombine.low %v353, %v369
      %v378 = vcombine.high %v353, %v369
      %v380 = vunpack.c.l.s4 1934713408
      %v381 = vunpack.c.0.s8 %v380
      %v382 = vlaneseq
      %v383 = vshrl.u32 %v382, 7
      %v384 = vsub.s32 %v381, %v383
      %v385 = vrot.slane %v377, %v384
      %v387 = vunpack.c.l.s4 1934713408
      %v388 = vunpack.c.0.s8 %v387
      %v389 = vlaneseq
      %v390 = vshrl.u32 %v389, 7
      %v391 = vsub.s32 %v388, %v390
      %v392 = vrot.slane %v378, %v391
      %v393 = vcombine.low %v360, %v376
      %v394 = vcombine.high %v360, %v376
      %v396 = vunpack.c.l.s4 1934713408
      %v397 = vunpack.c.0.s8 %v396
      %v398 = vlaneseq
      %v399 = vshrl.u32 %v398, 7
      %v400 = vsub.s32 %v397, %v399
      %v401 = vrot.slane %v393, %v400
      %v403 = vunpack.c.l.s4 1934713408
      %v404 = vunpack.c.0.s8 %v403
      %v405 = vlaneseq
      %v406 = vshrl.u32 %v405, 7
      %v407 = vsub.s32 %v404, %v406
      %v408 = vrot.slane %v394, %v407
      %v409 = vcombine.high %v385, 0.0
      %v410 = vcombine.high %v392, 0.0
      %v411 = vcombine.high %v401, 0.0
      %v412 = vcombine.high %v408, 0.0
      %v413 = vcombine.low %v317, %v324
      %v415 = vunpack.c.l.s4 1983009808
      %v416 = vunpack.c.0.s8 %v415
      %v417 = vlaneseq
      %v418 = vshrl.u32 %v417, 7
      %v419 = vsub.s32 %v416, %v418
      %v420 = vrot.slane %v413, %v419
      %v421 = vcombine.low %v341, %v342
      %v423 = vunpack.c.l.s4 1983009808
      %v424 = vunpack.c.0.s8 %v423
      %v425 = vlaneseq
      %v426 = vshrl.u32 %v425, 7
      %v427 = vsub.s32 %v424, %v426
      %v428 = vrot.slane %v421, %v427
      %v429 = vcombine.low %v333, %v340
      %v431 = vunpack.c.l.s4 1983009808
      %v432 = vunpack.c.0.s8 %v431
      %v433 = vlaneseq
      %v434 = vshrl.u32 %v433, 7
      %v435 = vsub.s32 %v432, %v434
      %v436 = vrot.slane %v429, %v435
      %v437 = vcombine.low %v343, %v344
      %v439 = vunpack.c.l.s4 1983009808
      %v440 = vunpack.c.0.s8 %v439
      %v441 = vlaneseq
      %v442 = vshrl.u32 %v441, 7
      %v443 = vsub.s32 %v440, %v442
      %v444 = vrot.slane %v437, %v443
      %v445 = vcombine.low %v420, %v428
      %v446 = vcombine.high %v420, %v428
      %v448 = vunpack.c.l.s4 1934713408
      %v449 = vunpack.c.0.s8 %v448
      %v450 = vlaneseq
      %v451 = vshrl.u32 %v450, 7
      %v452 = vsub.s32 %v449, %v451
      %v453 = vrot.slane %v445, %v452
      %v455 = vunpack.c.l.s4 1934713408
      %v456 = vunpack.c.0.s8 %v455
      %v457 = vlaneseq
      %v458 = vshrl.u32 %v457, 7
      %v459 = vsub.s32 %v456, %v458
      %v460 = vrot.slane %v446, %v459
      %v461 = vcombine.low %v436, %v444
      %v462 = vcombine.high %v436, %v444
      %v464 = vunpack.c.l.s4 1934713408
      %v465 = vunpack.c.0.s8 %v464
      %v466 = vlaneseq
      %v467 = vshrl.u32 %v466, 7
      %v468 = vsub.s32 %v465, %v467
      %v469 = vrot.slane %v461, %v468
      %v471 = vunpack.c.l.s4 1934713408
      %v472 = vunpack.c.0.s8 %v471
      %v473 = vlaneseq
      %v474 = vshrl.u32 %v473, 7
      %v475 = vsub.s32 %v472, %v474
      %v476 = vrot.slane %v462, %v475
      %v477 = vcombine.low %v453, %v469
      %v478 = vcombine.high %v453, %v469
      %v479 = vcombine.low %v460, %v476
      %v480 = vcombine.high %v460, %v476
      %v481 = vcombine.low %v385, %v392
      %v483 = vunpack.c.l.s4 1983009808
      %v484 = vunpack.c.0.s8 %v483
      %v485 = vlaneseq
      %v486 = vshrl.u32 %v485, 7
      %v487 = vsub.s32 %v484, %v486
      %v488 = vrot.slane %v481, %v487
      %v489 = vcombine.low %v409, %v410
      %v491 = vunpack.c.l.s4 1983009808
      %v492 = vunpack.c.0.s8 %v491
      %v493 = vlaneseq
      %v494 = vshrl.u32 %v493, 7
      %v495 = vsub.s32 %v492, %v494
      %v496 = vrot.slane %v489, %v495
      %v497 = vcombine.low %v401, %v408
      %v499 = vunpack.c.l.s4 1983009808
      %v500 = vunpack.c.0.s8 %v499
      %v501 = vlaneseq
      %v502 = vshrl.u32 %v501, 7
      %v503 = vsub.s32 %v500, %v502
      %v504 = vrot.slane %v497, %v503
      %v505 = vcombine.low %v411, %v412
      %v507 = vunpack.c.l.s4 1983009808
      %v508 = vunpack.c.0.s8 %v507
      %v509 = vlaneseq
      %v510 = vshrl.u32 %v509, 7
      %v511 = vsub.s32 %v508, %v510
      %v512 = vrot.slane %v505, %v511
      %v513 = vcombine.low %v488, %v496
      %v514 = vcombine.high %v488, %v496
      %v516 = vunpack.c.l.s4 1934713408
      %v517 = vunpack.c.0.s8 %v516
      %v518 = vlaneseq
      %v519 = vshrl.u32 %v518, 7
      %v520 = vsub.s32 %v517, %v519
      %v521 = vrot.slane %v513, %v520
      %v523 = vunpack.c.l.s4 1934713408
      %v524 = vunpack.c.0.s8 %v523
      %v525 = vlaneseq
      %v526 = vshrl.u32 %v525, 7
      %v527 = vsub.s32 %v524, %v526
      %v528 = vrot.slane %v514, %v527
      %v529 = vcombine.low %v504, %v512
      %v530 = vcombine.high %v504, %v512
      %v532 = vunpack.c.l.s4 1934713408
      %v533 = vunpack.c.0.s8 %v532
      %v534 = vlaneseq
      %v535 = vshrl.u32 %v534, 7
      %v536 = vsub.s32 %v533, %v535
      %v537 = vrot.slane %v529, %v536
      %v539 = vunpack.c.l.s4 1934713408
      %v540 = vunpack.c.0.s8 %v539
      %v541 = vlaneseq
      %v542 = vshrl.u32 %v541, 7
      %v543 = vsub.s32 %v540, %v542
      %v544 = vrot.slane %v530, %v543
      %v545 = vcombine.low %v521, %v537
      %v546 = vcombine.high %v521, %v537
      %v547 = vcombine.low %v528, %v544
      %v548 = vcombine.high %v528, %v544
      %551 = vrot.lane.b32.xlu0 %v478, 16
      %v552 = vpop.permute.xlu0 %551
      %553 = vrot.lane.b32.xlu0 %v546, 16
      %v554 = vpop.permute.xlu0 %553
      %559 = vrot.lane.b32.xlu0 %v479, 32
      %v560 = vpop.permute.xlu0 %559
      %561 = vrot.lane.b32.xlu0 %v547, 32
      %v562 = vpop.permute.xlu0 %561
      %567 = vrot.lane.b32.xlu0 %v480, 48
      %v568 = vpop.permute.xlu0 %567
      %569 = vrot.lane.b32.xlu0 %v548, 48
      %v570 = vpop.permute.xlu0 %569
      %v573 = vsel %vm197, %v477, %v552
      %v574 = vsel %vm197, %v545, %v554
      %vm575 = vcmask 261120
      %v576 = vsel %vm575, %v573, %v560
      %v577 = vsel %vm575, %v574, %v562
      %vm578 = vcmask 392192
      %v579 = vsel %vm578, %v576, %v568
      %v580 = vsel %vm578, %v577, %v570
      %v581 = vpack.c.bf16 %v580, %v579
      %v584 = vunpack.c.l.b16 %v275
      %v585 = vunpack.c.l.b16 %v276
      %v586 = vpack.c.b16 %v585, %v584
      %v588 = vsel %vm197, %v586, 0
      %590 = vmatprep.subr.bf16.mxu0 0
      %591 = vmatpush1.bf16.msra.mxu0 %v581
      %592 = vmatprep.subr.bf16.mxu0 0
      %593 = vmatpush1.bf16.msra.mxu0 0
      %594 = vmatprep.subr.bf16.mxu0 0
      %595 = vmatpush1.bf16.msra.mxu0 0
      %596 = vmatprep.subr.bf16.mxu0 0
      %597 = vmatpush1.bf16.msra.mxu0 0
      %598 = vmatprep.subr.bf16.mxu0 0
      %599 = vmatpush1.bf16.msra.mxu0 0
      %600 = vmatprep.subr.bf16.mxu0 0
      %601 = vmatpush1.bf16.msra.mxu0 0
      %602 = vmatprep.subr.bf16.mxu0 0
      %603 = vmatpush1.bf16.msra.mxu0 0
      %604 = vmatprep.subr.bf16.mxu0 0
      %605 = vmatpush1.bf16.msra.mxu0 0
      %606 = vmatprep.subr.bf16.mxu0 0
      %607 = vmatpush1.bf16.msra.mxu0 0
      %608 = vmatprep.subr.bf16.mxu0 0
      %609 = vmatpush1.bf16.msra.mxu0 0
      %610 = vmatprep.subr.bf16.mxu0 0
      %611 = vmatpush1.bf16.msra.mxu0 0
      %612 = vmatprep.subr.bf16.mxu0 0
      %613 = vmatpush1.bf16.msra.mxu0 0
      %614 = vmatprep.subr.bf16.mxu0 0
      %615 = vmatpush1.bf16.msra.mxu0 0
      %616 = vmatprep.subr.bf16.mxu0 0
      %617 = vmatpush1.bf16.msra.mxu0 0
      %618 = vmatprep.subr.bf16.mxu0 0
      %619 = vmatpush1.bf16.msra.mxu0 0
      %620 = vmatprep.subr.bf16.mxu0 0
      %621 = vmatpush1.bf16.msra.mxu0 0
      %622 = vmatprep.mubr.bf16.mxu0 0
      %623 = vmatmul.mubr.bf16.gmra.mrb[0].mxu0 %v588
      %v624 = vpop.f32.mrb[0].mxu0
      %v625 = vadd.f32 0.0, %v624
      %v626 = vpop.f32.mrb[0].mxu0
      %v627 = vpop.f32.mrb[0].mxu0
      %v628 = vadd.f32 0.0, %v627
      %v629 = vpop.f32.mrb[0].mxu0
      %630 = vdwg.mxu0
      %vm631 = vcmask 523264
      %632 = vst.msk [vmem:[%s175] sm:$0xff] %vm631, %v625
      %633 = vst.msk [vmem:[%s175 + $0x8] sm:$0xff] %vm631, %v628
      %p634 = scmp.lt.s32.totalorder %s14, 1
      %s635 = scalar_select %p634, %s14, 1
      %s636 = smul.addr %s635, 2
      %s637 = smul.addr %s636, 8
      %s638 = scalar_lea.vmem %s3, %s637
      // Predicated region
      $region33: #{data_augmentation.1} parent=31 // pred_check
        %p639 = pneg %p100
      $region34: #{data_augmentation.1} parent=31 // pred_check_branch
        %641 = sbr.rel (%p639) target = $region36
      $region35: #{data_augmentation.1} parent=31 // pred_region
        _
      $region36: #{data_augmentation.1} parent=31 // pred_fallthru
        _
    $region32: #{data_augmentation.1} parent=5 // pred_fallthru
      _
    %p642 = scmp.le.s32.totalorder 2, %s9
    // Predicated region
    $region37: #{data_augmentation.1} parent=5 // pred_check
      %p643 = pneg %p642
    $region38: #{data_augmentation.1} parent=5 // pred_check_branch
      %645 = sbr.rel (%p643) target = $region40
    $region39: #{data_augmentation.1} parent=5 // pred_region
      %s646 = ssub.s32 %s9, 2
      // Predicated region
      $region41: #{data_augmentation.1} parent=39 // pred_check
        %p647 = pneg %p106
      $region42: #{data_augmentation.1} parent=39 // pred_check_branch
        %649 = sbr.rel (%p647) target = $region44
      $region43: #{data_augmentation.1} parent=39 // pred_region
        %p650 = scmp.lt.s32.totalorder %s15, 1
        %s651 = scalar_select %p650, %s15, 1
        %s652 = smul.addr %s651, 2
        %s653 = smul.addr %s652, 8
        %s654 = scalar_lea.vmem %s3, %s653
      $region44: #{data_augmentation.1} parent=39 // pred_fallthru
        _
    $region40: #{data_augmentation.1} parent=5 // pred_fallthru
      _
  $region6: #{data_augmentation.1} parent=0 // loop_footer
    %s13 = sadd.s32 1, %s9
  $region7: #{data_augmentation.1} parent=0 // loop_footer_branch
    %8 = sbr.rel target = $region3
  $region8: #{data_augmentation.1} parent=0 // loop_exit
    _

</llo_original>
